<compile_context>
chip_gen: v6e
topology: v6e:2x2x1
jax: 0.10.0
libtpu: 0.0.40
codegen_flags: <defaults>
</compile_context>

<pallas_src>
import functools

import jax
import jax.numpy as jnp
from jax.experimental import pallas as pl
from jax.experimental.pallas import tpu as pltpu

BN_EPS = 1e-5


def _round_up(x: int, m: int) -> int:
    return ((x + m - 1) // m) * m


def _fused_encoder_kernel(x_ref, *refs, n_layers: int, compute_dtype):
    """Fused multi-stage encoder, batch-on-lanes orientation.

    x_ref:  (bm, D_in)  contiguous batch tile (f32)
    refs:   w1,b1, w2,b2, ..., o_ref
            w_l: (D_l_out, D_l_in)  BN-folded, PyTorch layout, compute_dtype
            b_l: (D_l_out, 1)       BN-folded, f32
    o_ref:  (D_out_last, bm)        lane-dense output tile
    """
    o_ref = refs[-1]
    # Single in-kernel transpose: batch -> lane axis. Everything downstream is
    # lane-dense (unmasked stores, dense VPU/EUP work, MXU N = bm).
    h = x_ref[...].T                                   # (D_in, bm), f32
    for layer in range(n_layers):
        w = refs[2 * layer][...]                       # (D_out, D_in)
        b = refs[2 * layer + 1][...]                   # (D_out, 1)
        # MXU matmul (bf16 operands by default) with f32 accumulation;
        # bias add on VPU, tanh on EUP, all in f32.
        h = jnp.tanh(
            jnp.dot(w, h.astype(compute_dtype), preferred_element_type=jnp.float32)
            + b
        )
    o_ref[...] = h.astype(o_ref.dtype)                 # lane-dense store


def _fold_bn_into_linear(w, b, gamma, beta, mean, var, *, use_bnorm: bool,
                         compute_dtype):
    """Fold eval-mode BatchNorm1d into the Linear params.

    w stays in PyTorch (D_out, D_in) layout (batch-on-lanes kernel needs no
    transpose).  Bias is reshaped to (D_out, 1) so it broadcasts over lanes.
    """
    if use_bnorm:
        scale = gamma * jax.lax.rsqrt(var + BN_EPS)    # (1, D_out)
        w_f = w * scale.reshape(-1, 1)                 # scale each output row
        b_f = (b - mean) * scale + beta
    else:
        w_f, b_f = w, b
    return w_f.astype(compute_dtype), b_f.reshape(-1, 1).astype(jnp.float32)


def vanilla_encoder(x, params, *, use_bnorm: bool, block_m: int = 4096,
                    compute_dtype=jnp.bfloat16):
    """Forward pass of _VanillaEncoder (eval mode): Flatten, then fused stages.

    x:      (batch, seq_len, n_features)
    params: list of (w, b, gamma, beta, mean, var) per layer,
            w in PyTorch (D_out, D_in) layout, others (1, D_out).
    Returns (batch, layersizes[-1]) float32, matching the PyTorch module.
    """
    B = x.shape[0]
    h = x.reshape(B, -1).astype(jnp.float32)           # nn.Flatten(start_dim=1)
    D_in = h.shape[1]

    folded = [_fold_bn_into_linear(*p, use_bnorm=use_bnorm,
                                   compute_dtype=compute_dtype) for p in params]
    n_layers = len(folded)
    D_out = folded[-1][0].shape[0]

    # Batch tile: single full-extent block for small batches; otherwise a
    # lane-aligned (multiple-of-128) tile.  No host-side padding: the final
    # partial block's OOB rows/lanes are masked by the pipeline on store.
    bm = min(block_m, B)
    if bm < B:
        bm = _round_up(bm, 128)
        if bm >= B:
            bm = B
    grid = (pl.cdiv(B, bm),)

    in_specs = [pl.BlockSpec((bm, D_in), lambda i: (i, 0))]
    flat_params = []
    for (w_f, b_f) in folded:
        # Full-array blocks with constant index_map: weights/biases stay
        # VMEM-resident across all batch tiles (no re-DMA per step).
        in_specs.append(pl.BlockSpec(w_f.shape, lambda i: (0, 0)))
        in_specs.append(pl.BlockSpec(b_f.shape, lambda i: (0, 0)))
        flat_params += [w_f, b_f]

    flops = 2 * B * sum(int(w.shape[0]) * int(w.shape[1]) for w, _ in folded)
    transcendentals = B * sum(int(w.shape[0]) for w, _ in folded)
    bytes_accessed = (
        int(h.size) * 4 + B * D_out * 4
        + sum(int(w.size) * w.dtype.itemsize + int(b.size) * 4 for w, b in folded)
    )

    kernel = functools.partial(_fused_encoder_kernel, n_layers=n_layers,
                               compute_dtype=compute_dtype)
    out_t = pl.pallas_call(
        kernel,
        out_shape=jax.ShapeDtypeStruct((D_out, B), jnp.float32),
        grid=grid,
        in_specs=in_specs,
        out_specs=pl.BlockSpec((D_out, bm), lambda i: (0, i)),
        compiler_params=pltpu.CompilerParams(dimension_semantics=("parallel",)),
        cost_estimate=pl.CostEstimate(flops=flops,
                                      transcendentals=transcendentals,
                                      bytes_accessed=bytes_accessed),
    )(h, *flat_params)
    # Back to module orientation (batch, D_out): touches only the tiny
    # (D_out, B) result, not the (B, D_in) input.
    return out_t.T


def init_params(key, input_size, layersizes):
    """Deterministic parameter init (mimics PyTorch Linear default uniform init)."""
    params = []
    d_in = input_size
    for lsize in layersizes:
        key, kw, kb = jax.random.split(key, 3)
        bound = 1.0 / jnp.sqrt(d_in)
        w = jax.random.uniform(kw, (lsize, d_in), jnp.float32, -bound, bound)
        b = jax.random.uniform(kb, (1, lsize), jnp.float32, -bound, bound)
        # BatchNorm1d defaults: gamma=1, beta=0, running_mean=0, running_var=1
        gamma = jnp.ones((1, lsize), jnp.float32)
        beta = jnp.zeros((1, lsize), jnp.float32)
        mean = jnp.zeros((1, lsize), jnp.float32)
        var = jnp.ones((1, lsize), jnp.float32)
        params.append((w, b, gamma, beta, mean, var))
        d_in = lsize
    return params


def _reference(x, params, *, use_bnorm: bool):
    """Pure-JAX reference of the original (unfused) eval-mode math."""
    h = x.reshape(x.shape[0], -1)
    for (w, b, gamma, beta, mean, var) in params:
        y = h @ w.T + b
        if use_bnorm:
            y = (y - mean) / jnp.sqrt(var + BN_EPS) * gamma + beta
        h = jnp.tanh(y)
    return h


if __name__ == "__main__":
    # Config consistent with the module:
    #   seq_len=8, n_features=4 -> input_size=32; layersizes=(16, 8)
    seq_len, n_features = 8, 4
    layersizes = (16, 8)
    batchnorm = True      # eval-mode batchnorm (running stats)
    # dropout_p is irrelevant in eval mode (identity)

    key = jax.random.PRNGKey(0)
    kx, kp, kx2 = jax.random.split(key, 3)
    params = init_params(kp, seq_len * n_features, layersizes)

    # Small batch (single full-extent block); f32 compute for a tight check.
    x = jax.random.normal(kx, (2, seq_len, n_features), jnp.float32)
    out = vanilla_encoder(x, params, use_bnorm=batchnorm,
                          compute_dtype=jnp.float32)
    out = jax.block_until_ready(out)
    ref = _reference(x, params, use_bnorm=batchnorm)
    assert out.shape == (2, layersizes[-1])
    assert jnp.allclose(out, ref, atol=1e-5), "mismatch vs JAX reference (small batch)"

    # Larger batch exercising lane-aligned tiling + masked partial last block,
    # with the default bf16 MXU path (looser tolerance).
    x2 = jax.random.normal(kx2, (300, seq_len, n_features), jnp.float32)
    out2 = vanilla_encoder(x2, params, use_bnorm=batchnorm, block_m=128)
    out2 = jax.block_until_ready(out2)
    ref2 = _reference(x2, params, use_bnorm=batchnorm)
    assert out2.shape == (300, layersizes[-1])
    assert jnp.allclose(out2, ref2, atol=5e-2), "mismatch vs JAX reference (tiled batch)"

    print("KERNEL_OK")
</pallas_src>

<mosaic_0001>
module attributes {stable_mosaic.version = 11 : i64} {
  func.func @_fused_encoder_kernel(%arg0: i32, %arg1: memref<2x32xf32, #tpu.memory_space<vmem>>, %arg2: memref<16x32xf32, #tpu.memory_space<vmem>>, %arg3: memref<16x1xf32, #tpu.memory_space<vmem>>, %arg4: memref<8x16xf32, #tpu.memory_space<vmem>>, %arg5: memref<8x1xf32, #tpu.memory_space<vmem>>, %arg6: memref<8x2xf32, #tpu.memory_space<vmem>>) attributes {dimension_semantics = [#tpu.dimension_semantics<parallel>], iteration_bounds = array<i64: 1>, scalar_prefetch = 0 : i64, scratch_operands = 0 : i64, tpu.core_type = #tpu.core_type<tc>, window_params = [{transform_indices = @transform_0, window_bounds = array<i64: 2, 32>}, {pipeline_mode = #tpu.pipeline_mode<synchronous>, transform_indices = @transform_1, window_bounds = array<i64: 16, 32>}, {pipeline_mode = #tpu.pipeline_mode<synchronous>, transform_indices = @transform_2, window_bounds = array<i64: 16, 1>}, {pipeline_mode = #tpu.pipeline_mode<synchronous>, transform_indices = @transform_3, window_bounds = array<i64: 8, 16>}, {pipeline_mode = #tpu.pipeline_mode<synchronous>, transform_indices = @transform_4, window_bounds = array<i64: 8, 1>}, {transform_indices = @transform_5, window_bounds = array<i64: 8, 2>}]} {
    %c0 = arith.constant 0 : index
    %c0_0 = arith.constant 0 : index
    %0 = vector.load %arg1[%c0, %c0_0] : memref<2x32xf32, #tpu.memory_space<vmem>>, vector<2x32xf32>
    %1 = tpu.transpose %0, [1, 0] : vector<2x32xf32> -> vector<32x2xf32>
    %c0_1 = arith.constant 0 : index
    %c0_2 = arith.constant 0 : index
    %2 = vector.load %arg2[%c0_1, %c0_2] : memref<16x32xf32, #tpu.memory_space<vmem>>, vector<16x32xf32>
    %c0_3 = arith.constant 0 : index
    %c0_4 = arith.constant 0 : index
    %3 = vector.load %arg3[%c0_3, %c0_4] : memref<16x1xf32, #tpu.memory_space<vmem>>, vector<16x1xf32>
    %cst = arith.constant dense<0.000000e+00> : vector<16x2xf32>
    %4 = tpu.matmul %2, %1, %cst {dimension_numbers = #tpu.dot_dimension_numbers<[1], [0], [0], [1], [0, 0, 1, 1], [], []>} : vector<16x32xf32>, vector<32x2xf32>, vector<16x2xf32> -> vector<16x2xf32>
    %5 = vector.broadcast %3 : vector<16x1xf32> to vector<16x2xf32>
    %6 = arith.addf %4, %5 : vector<16x2xf32>
    %7 = math.tanh %6 : vector<16x2xf32>
    %c0_5 = arith.constant 0 : index
    %c0_6 = arith.constant 0 : index
    %8 = vector.load %arg4[%c0_5, %c0_6] : memref<8x16xf32, #tpu.memory_space<vmem>>, vector<8x16xf32>
    %c0_7 = arith.constant 0 : index
    %c0_8 = arith.constant 0 : index
    %9 = vector.load %arg5[%c0_7, %c0_8] : memref<8x1xf32, #tpu.memory_space<vmem>>, vector<8x1xf32>
    %cst_9 = arith.constant dense<0.000000e+00> : vector<8x2xf32>
    %10 = tpu.matmul %8, %7, %cst_9 {dimension_numbers = #tpu.dot_dimension_numbers<[1], [0], [0], [1], [0, 0, 1, 1], [], []>} : vector<8x16xf32>, vector<16x2xf32>, vector<8x2xf32> -> vector<8x2xf32>
    %11 = vector.broadcast %9 : vector<8x1xf32> to vector<8x2xf32>
    %12 = arith.addf %10, %11 : vector<8x2xf32>
    %13 = math.tanh %12 : vector<8x2xf32>
    %c0_10 = arith.constant 0 : index
    %c0_11 = arith.constant 0 : index
    %14 = vector.load %arg6[%c0_10, %c0_11] : memref<8x2xf32, #tpu.memory_space<vmem>>, vector<8x2xf32>
    tpu.vector_store %arg6[%c0_10, %c0_11], %13 {strides = array<i32>} : memref<8x2xf32, #tpu.memory_space<vmem>>, vector<8x2xf32>,
    return
  }
  func.func @transform_0(%arg0: i32) -> (i32, i32) {
    %c0_i32 = arith.constant 0 : i32
    %c0_i32_0 = arith.constant 0 : i32
    return %arg0, %c0_i32 : i32, i32
  }
  func.func @transform_1(%arg0: i32) -> (i32, i32) {
    %c0_i32 = arith.constant 0 : i32
    %c0_i32_0 = arith.constant 0 : i32
    %c0_i32_1 = arith.constant 0 : i32
    return %c0_i32, %c0_i32_0 : i32, i32
  }
  func.func @transform_2(%arg0: i32) -> (i32, i32) {
    %c0_i32 = arith.constant 0 : i32
    %c0_i32_0 = arith.constant 0 : i32
    %c0_i32_1 = arith.constant 0 : i32
    return %c0_i32, %c0_i32_0 : i32, i32
  }
  func.func @transform_3(%arg0: i32) -> (i32, i32) {
    %c0_i32 = arith.constant 0 : i32
    %c0_i32_0 = arith.constant 0 : i32
    %c0_i32_1 = arith.constant 0 : i32
    return %c0_i32, %c0_i32_0 : i32, i32
  }
  func.func @transform_4(%arg0: i32) -> (i32, i32) {
    %c0_i32 = arith.constant 0 : i32
    %c0_i32_0 = arith.constant 0 : i32
    %c0_i32_1 = arith.constant 0 : i32
    return %c0_i32, %c0_i32_0 : i32, i32
  }
  func.func @transform_5(%arg0: i32) -> (i32, i32) {
    %c0_i32 = arith.constant 0 : i32
    %c0_i32_0 = arith.constant 0 : i32
    return %c0_i32, %arg0 : i32, i32
  }
}

</mosaic_0001>

<llo_original>
// kernel: tpu_custom_call.1
$region0: #{tpu_custom_call.1}
  #allocation0 [shape = 'u32[]', space=smem, size = 0x4, offset = 0x4, fixed_abs, tag = 'smem constant byte address 0x4 - core index']
  #allocation1 [shape = 'u32[144,128]{1,0:T(1,128)}', space=vmem, size = 0x12000, scoped, tag = 'internal scratch']
  %s0 = inlined_call_operand.vmem [shape: f32[2,32], index: 0, kind: input, shape index: {}]
  %s1 = inlined_call_operand.vmem [shape: f32[16,32], index: 1, kind: input, shape index: {}]
  %s2 = inlined_call_operand.vmem [shape: f32[16,1], index: 2, kind: input, shape index: {}]
  %s3 = inlined_call_operand.vmem [shape: f32[8,16], index: 3, kind: input, shape index: {}]
  %s4 = inlined_call_operand.vmem [shape: f32[8,1], index: 4, kind: input, shape index: {}]
  %s5 = inlined_call_operand.vmem [shape: f32[8,2], index: 5, kind: output, shape index: {}]
  %s6 = sld [smem:[#allocation0]]
  $region30: #{tpu_custom_call.1} parent=0
    _
  %s8 = ssub.s32 1, %s6
  %s9 = scalar_select 0, %s8, %s6
  // Predicated region
  $region2: #{tpu_custom_call.1} parent=0 // pred_check
    _
  $region3: #{tpu_custom_call.1} parent=0 // pred_check_branch
    %11 = sbr.rel (0) target = $region5
  $region4: #{tpu_custom_call.1} parent=0 // pred_region
    _
  $region5: #{tpu_custom_call.1} parent=0 // pred_fallthru
    _
  // Predicated region
  $region6: #{tpu_custom_call.1} parent=0 // pred_check
    _
  $region7: #{tpu_custom_call.1} parent=0 // pred_check_branch
    %13 = sbr.rel (0) target = $region9
  $region8: #{tpu_custom_call.1} parent=0 // pred_region
    _
  $region9: #{tpu_custom_call.1} parent=0 // pred_fallthru
    _
  // Predicated region
  $region10: #{tpu_custom_call.1} parent=0 // pred_check
    _
  $region11: #{tpu_custom_call.1} parent=0 // pred_check_branch
    %15 = sbr.rel (0) target = $region13
  $region12: #{tpu_custom_call.1} parent=0 // pred_region
    _
  $region13: #{tpu_custom_call.1} parent=0 // pred_fallthru
    _
  // Predicated region
  $region14: #{tpu_custom_call.1} parent=0 // pred_check
    _
  $region15: #{tpu_custom_call.1} parent=0 // pred_check_branch
    %17 = sbr.rel (0) target = $region17
  $region16: #{tpu_custom_call.1} parent=0 // pred_region
    _
  $region17: #{tpu_custom_call.1} parent=0 // pred_fallthru
    _
  // Predicated region
  $region18: #{tpu_custom_call.1} parent=0 // pred_check
    _
  $region19: #{tpu_custom_call.1} parent=0 // pred_check_branch
    %19 = sbr.rel (0) target = $region21
  $region20: #{tpu_custom_call.1} parent=0 // pred_region
    _
  $region21: #{tpu_custom_call.1} parent=0 // pred_fallthru
    _
  %v20 = vld [vmem:[%s0] sm:$0x3]
  %v21 = vld [vmem:[%s1] sm:$0xff]
  %v22 = vld [vmem:[%s1 + $0x8] sm:$0xff]
  %v23 = vld [vmem:[%s2] sm:$0xff]
  %v24 = vld [vmem:[%s2 + $0x8] sm:$0xff]
  %26 = vset.pattern.permute.xlu0 0
  %27 = vperm.xlu0 %26, %v23
  %v28 = vpop.permute.xlu0 %27
  %31 = vset.pattern.permute.xlu0 0
  %32 = vperm.xlu0 %31, %v24
  %v33 = vpop.permute.xlu0 %32
  %vm35 = vcmask 261120
  %v37 = vsel %vm35, %v21, 0
  %v40 = vsel %vm35, %v22, 0
  %v43 = vsel %vm35, %v20, 0
  %45 = vmatprep.subr.mxu0 0.0
  %46 = vmatpush1.xpose.msra.mxu0 0.0
  %47 = vmatprep.subr.mxu0 0.0
  %48 = vmatpush1.xpose.msra.mxu0 0.0
  %49 = vmatprep.subr.mxu0 0.0
  %50 = vmatpush1.xpose.msra.mxu0 0.0
  %51 = vmatprep.subr.mxu0 0.0
  %52 = vmatpush1.xpose.msra.mxu0 0.0
  %53 = vmatprep.subr.mxu0 0.0
  %54 = vmatpush1.xpose.msra.mxu0 0.0
  %55 = vmatprep.subr.mxu0 0.0
  %56 = vmatpush1.xpose.msra.mxu0 0.0
  %57 = vmatprep.subr.mxu0 0.0
  %58 = vmatpush1.xpose.msra.mxu0 0.0
  %59 = vmatprep.subr.mxu0 0.0
  %60 = vmatpush1.xpose.msra.mxu0 0.0
  %61 = vmatprep.subr.mxu0 0.0
  %62 = vmatpush1.xpose.msra.mxu0 0.0
  %63 = vmatprep.subr.mxu0 0.0
  %64 = vmatpush1.xpose.msra.mxu0 0.0
  %65 = vmatprep.subr.mxu0 0.0
  %66 = vmatpush1.xpose.msra.mxu0 0.0
  %67 = vmatprep.subr.mxu0 0.0
  %68 = vmatpush1.xpose.msra.mxu0 0.0
  %69 = vmatprep.subr.mxu0 0.0
  %70 = vmatpush1.xpose.msra.mxu0 0.0
  %71 = vmatprep.subr.mxu0 0.0
  %72 = vmatpush1.xpose.msra.mxu0 0.0
  %73 = vmatprep.subr.mxu0 0.0
  %74 = vmatpush1.xpose.msra.mxu0 0.0
  %75 = vmatprep.subr.mxu0 0.0
  %76 = vmatpush1.xpose.msra.mxu0 %v43
  %77 = vmatprep.subr.mxu0 0.0
  %78 = vmatpush2.xpose.msra.mxu0 0.0
  %79 = vmatprep.subr.mxu0 0.0
  %80 = vmatpush2.xpose.msra.mxu0 0.0
  %81 = vmatprep.subr.mxu0 0.0
  %82 = vmatpush2.xpose.msra.mxu0 0.0
  %83 = vmatprep.subr.mxu0 0.0
  %84 = vmatpush2.xpose.msra.mxu0 0.0
  %85 = vmatprep.subr.mxu0 0.0
  %86 = vmatpush2.xpose.msra.mxu0 0.0
  %87 = vmatprep.subr.mxu0 0.0
  %88 = vmatpush2.xpose.msra.mxu0 0.0
  %89 = vmatprep.subr.mxu0 0.0
  %90 = vmatpush2.xpose.msra.mxu0 0.0
  %91 = vmatprep.subr.mxu0 0.0
  %92 = vmatpush2.xpose.msra.mxu0 0.0
  %93 = vmatprep.subr.mxu0 0.0
  %94 = vmatpush2.xpose.msra.mxu0 0.0
  %95 = vmatprep.subr.mxu0 0.0
  %96 = vmatpush2.xpose.msra.mxu0 0.0
  %97 = vmatprep.subr.mxu0 0.0
  %98 = vmatpush2.xpose.msra.mxu0 0.0
  %99 = vmatprep.subr.mxu0 0.0
  %100 = vmatpush2.xpose.msra.mxu0 0.0
  %101 = vmatprep.subr.mxu0 0.0
  %102 = vmatpush2.xpose.msra.mxu0 0.0
  %103 = vmatprep.subr.mxu0 0.0
  %104 = vmatpush2.xpose.msra.mxu0 0.0
  %105 = vmatprep.subr.mxu0 0.0
  %106 = vmatpush2.xpose.msra.mxu0 0.0
  %107 = vmatprep.subr.mxu0 0.0
  %108 = vmatpush2.xpose.msra.mxu0 0.0
  %109 = vmatprep.mubr.f32.mxu0 0.0
  %110 = vmatmul.mubr.f32.gmra.mxu0 %v37
  %v111 = vpop.f32.mrf.mxu0
  %v112 = vadd.f32 %v28, %v111
  %v113 = vpop.f32.mrf.mxu0
  %114 = vmatprep.mubr.f32.mxu0 0.0
  %115 = vmatmul.mubr.f32.gmra.mxu0 %v40
  %v116 = vpop.f32.mrf.mxu0
  %v117 = vadd.f32 %v33, %v116
  %v118 = vpop.f32.mrf.mxu0
  %119 = vdwg.mxu0
  %v120 = vtanh.pop %v112
  %v121 = vtanh.pop %v117
  %v122 = vld [vmem:[%s3] sm:$0xff]
  %v123 = vld [vmem:[%s4] sm:$0xff]
  %125 = vset.pattern.permute.xlu0 0
  %126 = vperm.xlu0 %125, %v123
  %v127 = vpop.permute.xlu0 %126
  %vm129 = vcmask 130048
  %v131 = vsel %vm129, %v122, 0
  %133 = vmatprep.subr.mxu0 0.0
  %134 = vmatpush1.msra.mxu0 0.0
  %135 = vmatprep.subr.mxu0 0.0
  %136 = vmatpush1.msra.mxu0 0.0
  %137 = vmatprep.subr.mxu0 0.0
  %138 = vmatpush1.msra.mxu0 0.0
  %139 = vmatprep.subr.mxu0 0.0
  %140 = vmatpush1.msra.mxu0 0.0
  %141 = vmatprep.subr.mxu0 0.0
  %142 = vmatpush1.msra.mxu0 0.0
  %143 = vmatprep.subr.mxu0 0.0
  %144 = vmatpush1.msra.mxu0 0.0
  %145 = vmatprep.subr.mxu0 0.0
  %146 = vmatpush1.msra.mxu0 0.0
  %147 = vmatprep.subr.mxu0 0.0
  %148 = vmatpush1.msra.mxu0 0.0
  %149 = vmatprep.subr.mxu0 0.0
  %150 = vmatpush1.msra.mxu0 0.0
  %151 = vmatprep.subr.mxu0 0.0
  %152 = vmatpush1.msra.mxu0 0.0
  %153 = vmatprep.subr.mxu0 0.0
  %154 = vmatpush1.msra.mxu0 0.0
  %155 = vmatprep.subr.mxu0 0.0
  %156 = vmatpush1.msra.mxu0 0.0
  %157 = vmatprep.subr.mxu0 0.0
  %158 = vmatpush1.msra.mxu0 0.0
  %159 = vmatprep.subr.mxu0 0.0
  %160 = vmatpush1.msra.mxu0 0.0
  %161 = vmatprep.subr.mxu0 0.0
  %162 = vmatpush1.msra.mxu0 %v121
  %163 = vmatprep.subr.mxu0 0.0
  %164 = vmatpush1.msra.mxu0 %v120
  %165 = vmatprep.subr.mxu0 0.0
  %166 = vmatpush2.msra.mxu0 0.0
  %167 = vmatprep.subr.mxu0 0.0
  %168 = vmatpush2.msra.mxu0 0.0
  %169 = vmatprep.subr.mxu0 0.0
  %170 = vmatpush2.msra.mxu0 0.0
  %171 = vmatprep.subr.mxu0 0.0
  %172 = vmatpush2.msra.mxu0 0.0
  %173 = vmatprep.subr.mxu0 0.0
  %174 = vmatpush2.msra.mxu0 0.0
  %175 = vmatprep.subr.mxu0 0.0
  %176 = vmatpush2.msra.mxu0 0.0
  %177 = vmatprep.subr.mxu0 0.0
  %178 = vmatpush2.msra.mxu0 0.0
  %179 = vmatprep.subr.mxu0 0.0
  %180 = vmatpush2.msra.mxu0 0.0
  %181 = vmatprep.subr.mxu0 0.0
  %182 = vmatpush2.msra.mxu0 0.0
  %183 = vmatprep.subr.mxu0 0.0
  %184 = vmatpush2.msra.mxu0 0.0
  %185 = vmatprep.subr.mxu0 0.0
  %186 = vmatpush2.msra.mxu0 0.0
  %187 = vmatprep.subr.mxu0 0.0
  %188 = vmatpush2.msra.mxu0 0.0
  %189 = vmatprep.subr.mxu0 0.0
  %190 = vmatpush2.msra.mxu0 0.0
  %191 = vmatprep.subr.mxu0 0.0
  %192 = vmatpush2.msra.mxu0 0.0
  %193 = vmatprep.subr.mxu0 0.0
  %194 = vmatpush2.msra.mxu0 0.0
  %195 = vmatprep.subr.mxu0 0.0
  %196 = vmatpush2.msra.mxu0 0.0
  %197 = vmatprep.mubr.f32.mxu0 0.0
  %198 = vmatmul.mubr.f32.gmra.mxu0 %v131
  %v199 = vpop.f32.mrf.mxu0
  %v200 = vadd.f32 %v127, %v199
  %v201 = vpop.f32.mrf.mxu0
  %202 = vdwg.mxu0
  %v203 = vtanh.pop %v200
  %vm204 = vcmask 15360
  %205 = vst.msk [vmem:[%s5] sm:$0xff] %vm204, %v203
  // Predicated region
  $region22: #{tpu_custom_call.1} parent=0 // pred_check
    _
  $region23: #{tpu_custom_call.1} parent=0 // pred_check_branch
    %207 = sbr.rel (0) target = $region25
  $region24: #{tpu_custom_call.1} parent=0 // pred_region
    _
  $region25: #{tpu_custom_call.1} parent=0 // pred_fallthru
    _
  // Predicated region
  $region26: #{tpu_custom_call.1} parent=0 // pred_check
    _
  $region27: #{tpu_custom_call.1} parent=0 // pred_check_branch
    %209 = sbr.rel (0) target = $region29
  $region28: #{tpu_custom_call.1} parent=0 // pred_region
    _
  $region29: #{tpu_custom_call.1} parent=0 // pred_fallthru
    _

</llo_original>
